<compile_context>
chip_gen: v7x
topology: tpu7x:2x2x1
jax: 0.10.0
libtpu: 0.0.40
codegen_flags: <defaults>
</compile_context>

<pallas_src>
import functools
from typing import Dict, List

import jax
import jax.numpy as jnp
from jax.experimental import pallas as pl
from jax.experimental.pallas import tpu as pltpu

_BN_EPS = 1e-5
_HI = jax.lax.Precision.HIGHEST


# ----------------------------------------------------------------------------
# VMEM / tiling helpers
# ----------------------------------------------------------------------------

def _round_up(x: int, m: int) -> int:
    return ((x + m - 1) // m) * m


def _vmem_capacity_bytes() -> int:
    """Physical VMEM per core; conservative v7x-safe fallback if undetectable."""
    try:
        return int(pltpu.get_tpu_info().vmem_capacity_bytes)
    except Exception:
        return 64 << 20


_VMEM_LIMIT = min(_vmem_capacity_bytes() // 2, 64 << 20)   # scoped-VMEM limit we request
_VMEM_BUDGET = _VMEM_LIMIT // 3                            # what the tile picker may spend


def _compiler_params(semantics):
    return pltpu.CompilerParams(dimension_semantics=semantics,
                                vmem_limit_bytes=_VMEM_LIMIT)


def _pick_batch_tile(rows: int, bytes_per_row: int, fixed_bytes: int = 0,
                     max_tile: int = 1024) -> int:
    """Row tile (multiple of 8) sized from an explicit per-step VMEM footprint.

    * single grid step for small batches (extra steps are pure overhead on the
      single-TC v5e/v6e and underfill the MXU M dim everywhere),
    * >= 2 steps only when every step still gets >= 128 rows (rows >= 256), so
      v7x's two TensorCores each see a full MXU M-tile,
    * otherwise the largest budget-fitting tile, rounded down to 128 rows.
    """
    align = 8
    rp = _round_up(max(rows, 1), align)
    budget = max(_VMEM_BUDGET - fixed_bytes, align * max(bytes_per_row, 1))
    cap = max(align, (budget // max(bytes_per_row, 1)) // align * align)
    if rp < 256:
        return min(rp, cap)
    if rp <= min(cap, max_tile):
        return _round_up(pl.cdiv(rp, 2), align)
    return max(align, (min(cap, max_tile) // 128) * 128)


def _pad_rows(x: jax.Array, multiple: int) -> jax.Array:
    rows = x.shape[0]
    padded = _round_up(rows, multiple)
    if padded == rows:
        return x
    pad = [(0, padded - rows)] + [(0, 0)] * (x.ndim - 1)
    return jnp.pad(x, pad)


# ----------------------------------------------------------------------------
# Kernels
# ----------------------------------------------------------------------------

def _softmax_kernel(x_ref, o_ref):
    """Numerically-stable softmax over the last axis of the current tile."""
    x = x_ref[...].astype(jnp.float32)
    e = jnp.exp(x - jnp.max(x, axis=-1, keepdims=True))
    o_ref[...] = (e / jnp.sum(e, axis=-1, keepdims=True)).astype(o_ref.dtype)


def _log_softmax_kernel(x_ref, o_ref):
    """Numerically-stable log_softmax over the last axis of the current tile."""
    x = x_ref[...].astype(jnp.float32)
    z = x - jnp.max(x, axis=-1, keepdims=True)
    o_ref[...] = (z - jnp.log(jnp.sum(jnp.exp(z), axis=-1, keepdims=True))
                  ).astype(o_ref.dtype)


def _branch_kernel(x_ref, w1_ref, b1_ref, w2_ref, b2_ref, logp_ref, scr_ref, *,
                   normalize_probs: bool, compute_dtype):
    """Fused branch: relu(x @ W1 + b1) @ W2 + b2, then a fused epilogue that
    writes BOTH log_softmax(y) and (softmax(y) if normalize_probs else y)."""
    cd = compute_dtype
    x = x_ref[0]                                   # (tb, Dmax)
    h = jnp.dot(x.astype(cd), w1_ref[0].astype(cd),
                preferred_element_type=jnp.float32) + b1_ref[0].astype(jnp.float32)
    h = jnp.maximum(h, 0.0)
    y = jnp.dot(h.astype(cd), w2_ref[0].astype(cd),
                preferred_element_type=jnp.float32) + b2_ref[0].astype(jnp.float32)
    z = y - jnp.max(y, axis=-1, keepdims=True)
    e = jnp.exp(z)
    s = jnp.sum(e, axis=-1, keepdims=True)
    logp_ref[0] = (z - jnp.log(s)).astype(logp_ref.dtype)
    if normalize_probs:
        scr_ref[0] = (e / s).astype(scr_ref.dtype)
    else:
        scr_ref[0] = y.astype(scr_ref.dtype)


def _recombine_kernel(pb_ref, xm_ref, w1b_ref, w1m_ref, b1_ref, w2_ref, b2_ref,
                      out_ref, beta_acc, *, compute_dtype):
    """log_softmax(relu(pb @ W1_beta + xm @ W1_masked + b1) @ W2 + b2).

    The beta partial product is computed once per batch tile (masked-key grid
    axis is innermost) and reused from VMEM scratch for every masked key."""
    cd = compute_dtype

    @pl.when(pl.program_id(1) == 0)
    def _():
        beta_acc[...] = jnp.dot(pb_ref[...].astype(cd), w1b_ref[...].astype(cd),
                                preferred_element_type=jnp.float32)

    h = beta_acc[...] + jnp.dot(xm_ref[0].astype(cd), w1m_ref[...].astype(cd),
                                preferred_element_type=jnp.float32)
    h = jnp.maximum(h + b1_ref[...].astype(jnp.float32), 0.0)
    y = jnp.dot(h.astype(cd), w2_ref[...].astype(cd),
                preferred_element_type=jnp.float32) + b2_ref[...].astype(jnp.float32)
    z = y - jnp.max(y, axis=-1, keepdims=True)
    out_ref[0] = (z - jnp.log(jnp.sum(jnp.exp(z), axis=-1, keepdims=True))
                  ).astype(out_ref.dtype)


# ----------------------------------------------------------------------------
# pallas_call wrappers
# ----------------------------------------------------------------------------

def _branch_forward_all(x_stack, w1, b1, w2, b2, *, normalize_probs, compute_dtype,
                        out_dtype):
    """One launch for all K leakage keys.

    x_stack: (K, B, Dmax) zero-padded leakages; w1: (K, Dmax, Hp); b1: (K, 1, Hp);
    w2: (K, Hp, C); b2: (K, 1, C).  Returns (logp, scr), each (K, Bp, C)."""
    K, B, Dm = x_stack.shape
    Hp = w1.shape[2]
    C = w2.shape[2]
    # Per-row live f32 bytes (double-buffered x + hidden + y + 2 double-buffered outs).
    bytes_per_row = 4 * (2 * Dm + 2 * Hp + 6 * C)
    # Double-buffered per-key weight / bias blocks.
    fixed_bytes = 2 * 4 * (Dm * Hp + Hp + Hp * C + C)
    tb = _pick_batch_tile(B, bytes_per_row, fixed_bytes)
    Bp = _round_up(B, tb)
    if Bp != B:
        x_stack = jnp.pad(x_stack, ((0, 0), (0, Bp - B), (0, 0)))

    kernel = functools.partial(_branch_kernel, normalize_probs=normalize_probs,
                               compute_dtype=compute_dtype)
    logp, scr = pl.pallas_call(
        kernel,
        out_shape=(jax.ShapeDtypeStruct((K, Bp, C), out_dtype),
                   jax.ShapeDtypeStruct((K, Bp, C), out_dtype)),
        grid=(K, Bp // tb),
        in_specs=[
            pl.BlockSpec((1, tb, Dm), lambda k, b: (k, b, 0)),   # activations
            pl.BlockSpec((1, Dm, Hp), lambda k, b: (k, 0, 0)),   # per-key weights
            pl.BlockSpec((1, 1, Hp), lambda k, b: (k, 0, 0)),
            pl.BlockSpec((1, Hp, C), lambda k, b: (k, 0, 0)),
            pl.BlockSpec((1, 1, C), lambda k, b: (k, 0, 0)),
        ],
        out_specs=[pl.BlockSpec((1, tb, C), lambda k, b: (k, b, 0)),
                   pl.BlockSpec((1, tb, C), lambda k, b: (k, b, 0))],
        compiler_params=_compiler_params(("parallel", "parallel")),
    )(x_stack, w1, b1, w2, b2)
    return logp, scr


def _recombine_targets(pb, xm, w1_beta, w1_masked, b1, w2, b2, *, compute_dtype,
                       out_dtype):
    """Recombination MLP for every masked key, beta block shared via scratch."""
    B, Db = pb.shape
    M, _, C = xm.shape
    Hp = w1_beta.shape[1]
    bytes_per_row = 4 * (2 * Db + 2 * C + 2 * Hp + 3 * C)
    fixed_bytes = 2 * 4 * (Db * Hp + C * Hp + Hp + Hp * C + C)
    tb = _pick_batch_tile(B, bytes_per_row, fixed_bytes)
    Bp = _round_up(B, tb)
    if Bp != B:
        pb = jnp.pad(pb, ((0, Bp - B), (0, 0)))
        xm = jnp.pad(xm, ((0, 0), (0, Bp - B), (0, 0)))

    kernel = functools.partial(_recombine_kernel, compute_dtype=compute_dtype)
    return pl.pallas_call(
        kernel,
        out_shape=jax.ShapeDtypeStruct((M, Bp, C), out_dtype),
        grid=(Bp // tb, M),                       # masked-key axis innermost
        in_specs=[
            pl.BlockSpec((tb, Db), lambda b, m: (b, 0)),
            pl.BlockSpec((1, tb, C), lambda b, m: (m, b, 0)),
            pl.BlockSpec((Db, Hp), lambda b, m: (0, 0)),
            pl.BlockSpec((C, Hp), lambda b, m: (0, 0)),
            pl.BlockSpec((1, Hp), lambda b, m: (0, 0)),
            pl.BlockSpec((Hp, C), lambda b, m: (0, 0)),
            pl.BlockSpec((1, C), lambda b, m: (0, 0)),
        ],
        out_specs=pl.BlockSpec((1, tb, C), lambda b, m: (m, b, 0)),
        scratch_shapes=[pltpu.VMEM((tb, Hp), jnp.float32)],
        compiler_params=_compiler_params(("parallel", "arbitrary")),
    )(pb, xm, w1_beta, w1_masked, b1, w2, b2)


def _rowwise_call(kernel, x: jax.Array) -> jax.Array:
    """Apply a per-row kernel over the last axis of x: [R, C] -> [R, C]."""
    R, C = x.shape
    tb = _pick_batch_tile(R, 4 * 4 * C)
    xp = _pad_rows(x, tb)
    Rp = xp.shape[0]
    out = pl.pallas_call(
        kernel,
        out_shape=jax.ShapeDtypeStruct((Rp, C), x.dtype),
        grid=(Rp // tb,),
        in_specs=[pl.BlockSpec((tb, C), lambda i: (i, 0))],
        out_specs=pl.BlockSpec((tb, C), lambda i: (i, 0)),
        compiler_params=_compiler_params(("parallel",)),
    )(xp)
    return out[:R] if Rp != R else out


def pallas_softmax_lastdim(x: jax.Array) -> jax.Array:
    return _rowwise_call(_softmax_kernel, x)


def pallas_log_softmax_lastdim(x: jax.Array) -> jax.Array:
    return _rowwise_call(_log_softmax_kernel, x)


# ----------------------------------------------------------------------------
# Model classes (JAX/Pallas port of the PyTorch modules)
# ----------------------------------------------------------------------------

class Branch:
    """BatchNorm1d -> Linear -> ReLU -> BatchNorm1d -> Linear (eval mode).

    Eval-mode BN is a per-feature affine map folded into the adjacent Linears at
    init; the hidden dim is zero-padded to a multiple of 128 (exact: ReLU(0)=0
    and the padded W2 rows are zero) so MXU tiles are full."""

    def __init__(self, key, dim_input: int, n_hidden: int, n_bits: int):
        n_classes = 1 << n_bits
        ks = jax.random.split(key, 12)
        f32 = jnp.float32
        # Linear params stored transposed relative to torch: (in, out).
        self.w1 = 0.1 * jax.random.normal(ks[0], (dim_input, n_hidden), f32)
        self.b1 = 0.1 * jax.random.normal(ks[1], (n_hidden,), f32)
        self.w2 = 0.1 * jax.random.normal(ks[2], (n_hidden, n_classes), f32)
        self.b2 = 0.1 * jax.random.normal(ks[3], (n_classes,), f32)
        # Eval-mode BatchNorm1d params + (non-trivial) running stats.
        self.bn0_gamma = 1.0 + 0.1 * jax.random.normal(ks[4], (dim_input,), f32)
        self.bn0_beta = 0.1 * jax.random.normal(ks[5], (dim_input,), f32)
        self.bn0_mean = 0.1 * jax.random.normal(ks[6], (dim_input,), f32)
        self.bn0_var = jax.random.uniform(ks[7], (dim_input,), f32, 0.5, 1.5)
        self.bn1_gamma = 1.0 + 0.1 * jax.random.normal(ks[8], (n_hidden,), f32)
        self.bn1_beta = 0.1 * jax.random.normal(ks[9], (n_hidden,), f32)
        self.bn1_mean = 0.1 * jax.random.normal(ks[10], (n_hidden,), f32)
        self.bn1_var = jax.random.uniform(ks[11], (n_hidden,), f32, 0.5, 1.5)

        self.dim_input = dim_input
        self.n_classes = n_classes
        self.hp = _round_up(n_hidden, 128)
        hpad = self.hp - n_hidden

        # Fold eval-mode BN into the Linears; pad the hidden dim to hp.
        a0 = self.bn0_gamma / jnp.sqrt(self.bn0_var + _BN_EPS)
        c0 = self.bn0_beta - self.bn0_mean * a0
        a1 = self.bn1_gamma / jnp.sqrt(self.bn1_var + _BN_EPS)
        c1 = self.bn1_beta - self.bn1_mean * a1
        self.w1_f = jnp.pad(self.w1 * a0[:, None], ((0, 0), (0, hpad)))
        self.b1_f = jnp.pad(jnp.dot(c0, self.w1, precision=_HI) + self.b1, (0, hpad))
        self.w2_f = jnp.pad(self.w2 * a1[:, None], ((0, hpad), (0, 0)))
        self.b2_f = jnp.dot(c1, self.w2, precision=_HI) + self.b2

    def forward(self, leakage: jax.Array) -> jax.Array:
        # Standalone entry point (the fused KnownPoI path does not go through it).
        _, scores = _branch_forward_all(
            leakage.astype(jnp.float32)[None],
            self.w1_f[None], self.b1_f.reshape(1, 1, -1),
            self.w2_f[None], self.b2_f.reshape(1, 1, -1),
            normalize_probs=False, compute_dtype=jnp.float32, out_dtype=jnp.float32)
        return scores[0, :leakage.shape[0]]

    def __call__(self, leakage: jax.Array) -> jax.Array:
        return self.forward(leakage)


class Recombine:
    """Base recombination container (forward is abstract, as in the reference)."""

    def __init__(self, keys_leakages: List[str], n_bits: int = 8,
                 normalize_probs: bool = True):
        self.normalize_probs = normalize_probs
        self.n_bits = n_bits
        self.dict_leakages = keys_leakages

    def __repr__(self):
        return "Recombine: {}".format(self.dict_leakages)

    @staticmethod
    def normalize(x: jax.Array) -> jax.Array:
        # softmax(x, dim=-1). TODO(synk): utils.isProbDist runtime assert skipped.
        return pallas_softmax_lastdim(x)

    def forward(self, leakages: Dict[str, jax.Array]) -> Dict[str, jax.Array]:
        raise NotImplementedError

    def __call__(self, *args, **kwargs):
        return self.forward(*args, **kwargs)


class NaiveRecombine(Recombine):
    """Per-key log_softmax, then MLP + log_softmax over (beta shares, masked)."""

    def __init__(self, keys_leakages: List[str], n_bits: int = 8, n_shares: int = 2,
                 n_hidden: int = 100, normalize_probs: bool = False, *, key):
        super().__init__(keys_leakages, n_bits, normalize_probs)
        n_classes = 1 << n_bits
        self.n_shares = n_shares
        self.n_hidden = n_hidden
        self.n_classes = n_classes
        ks = jax.random.split(key, 4)
        f32 = jnp.float32
        self.w1 = 0.05 * jax.random.normal(ks[0], (n_shares * n_classes, n_hidden), f32)
        self.b1 = 0.05 * jax.random.normal(ks[1], (n_hidden,), f32)
        self.w2 = 0.05 * jax.random.normal(ks[2], (n_hidden, n_classes), f32)
        self.b2 = 0.05 * jax.random.normal(ks[3], (n_classes,), f32)

        # Pad hidden 100 -> 128 (exact) and split W1 into beta / masked row blocks
        # so the beta partial product is computed once and reused per masked key.
        self.hp = _round_up(n_hidden, 128)
        hpad = self.hp - n_hidden
        w1p = jnp.pad(self.w1, ((0, 0), (0, hpad)))
        nb = (n_shares - 1) * n_classes
        self.w1_beta = w1p[:nb]
        self.w1_masked = w1p[nb:]
        self.b1_p = jnp.pad(self.b1, (0, hpad)).reshape(1, self.hp)
        self.w2_p = jnp.pad(self.w2, ((0, hpad), (0, 0)))
        self.b2_p = self.b2.reshape(1, n_classes)

    def __repr__(self):
        return super().__repr__() + " with Linear({}->{}), Linear({}->{})".format(
            self.n_shares * self.n_classes, self.n_hidden, self.n_hidden, self.n_classes)

    def _mlp_targets(self, lk, log_probas, compute_dtype=jnp.float32):
        """Add 'target_*' entries to log_probas from already-(log)normalized lk."""
        keys = list(lk.keys())
        beta_keys = [k for k in keys if "beta" in k]
        masked_keys = [k for k in keys if "masked" in k]
        if not masked_keys:
            return log_probas
        assert len(beta_keys) + 1 == self.n_shares, \
            "NaiveRecombine expects n_shares-1 beta leakages"
        pb = (lk[beta_keys[0]] if len(beta_keys) == 1
              else jnp.concatenate([lk[k] for k in beta_keys], axis=-1))
        xm = jnp.stack([lk[k] for k in masked_keys], axis=0)
        B = pb.shape[0]
        res = _recombine_targets(pb, xm, self.w1_beta, self.w1_masked, self.b1_p,
                                 self.w2_p, self.b2_p, compute_dtype=compute_dtype,
                                 out_dtype=pb.dtype)
        for i, mk in enumerate(masked_keys):
            log_probas["target_" + mk.split("_")[1]] = res[i, :B]
        return log_probas

    def forward(self, leakages: Dict[str, jax.Array]) -> Dict[str, jax.Array]:
        # Standalone (unfused) path; KnownPoI.forward fuses the per-key softmaxes
        # into the branch kernel epilogue instead.
        keys = list(leakages.keys())
        stacked = jnp.concatenate([leakages[k] for k in keys], axis=0)
        logp = jnp.split(pallas_log_softmax_lastdim(stacked), len(keys), axis=0)
        log_probas = dict(zip(keys, logp))
        lk = leakages
        if self.normalize_probs:
            probs = jnp.split(self.normalize(stacked), len(keys), axis=0)
            lk = dict(zip(keys, probs))
        return self._mlp_targets(lk, log_probas)


class KnownPoI:
    """Per-leakage Branch NNs + MLP recombination (fused Pallas forward pass)."""

    def __init__(self, leakage_dims: Dict[str, int], n_hidden: int = 1000,
                 n_shares: int = 2, n_bits: int = 8, normalize_probs: bool = False,
                 share_weights: bool = False, *, key, matmul_dtype=jnp.float32,
                 **kwargs):
        self.n_shares = n_shares
        self.n_bits = n_bits
        self.leakage_dims = leakage_dims
        self.n_hidden = n_hidden
        self.normalize_probs = normalize_probs
        self.matmul_dtype = matmul_dtype          # jnp.bfloat16 -> bf16 MXU, f32 accum
        self._keys = list(leakage_dims.keys())
        self._n_classes = 1 << n_bits

        keys = jax.random.split(key, len(leakage_dims) + 1)
        if share_weights:
            max_dim = int(max(leakage_dims.values()))
            only_branch = Branch(keys[0], max_dim, n_hidden, n_bits)
            self.branches = {k: only_branch for k in leakage_dims}
        else:
            self.branches = {k: Branch(ki, d, n_hidden, n_bits)
                             for ki, (k, d) in zip(keys[:-1], leakage_dims.items())}
        self.recombine = NaiveRecombine(self._keys, n_bits=n_bits, n_shares=n_shares,
                                        n_hidden=100, normalize_probs=normalize_probs,
                                        key=keys[-1])

        # Pre-stack BN-folded, zero-padded per-key weights once -> one branch launch.
        self._dmax = int(max(br.w1_f.shape[0] for br in self.branches.values()))
        hp = next(iter(self.branches.values())).hp

        def pad_w1(br):
            return jnp.pad(br.w1_f, ((0, self._dmax - br.w1_f.shape[0]), (0, 0)))

        self._w1s = jnp.stack([pad_w1(self.branches[k]) for k in self._keys])
        self._b1s = jnp.stack([self.branches[k].b1_f.reshape(1, hp) for k in self._keys])
        self._w2s = jnp.stack([self.branches[k].w2_f for k in self._keys])
        self._b2s = jnp.stack([self.branches[k].b2_f.reshape(1, self._n_classes)
                               for k in self._keys])

    def forward(self, leak_dict: Dict[str, jax.Array]) -> Dict[str, jax.Array]:
        keys = self._keys
        B = leak_dict[keys[0]].shape[0]
        # Zero-pad every leakage to Dmax and stack along a key axis: ONE branch
        # launch for all keys, log_softmax / softmax fused in its epilogue.
        xs = jnp.stack(
            [jnp.pad(leak_dict[k].astype(jnp.float32),
                     ((0, 0), (0, self._dmax - leak_dict[k].shape[1])))
             for k in keys], axis=0)
        logp, scr = _branch_forward_all(
            xs, self._w1s, self._b1s, self._w2s, self._b2s,
            normalize_probs=self.normalize_probs,
            compute_dtype=self.matmul_dtype, out_dtype=jnp.float32)
        log_probas = {k: logp[i, :B] for i, k in enumerate(keys)}
        lk = {k: scr[i, :B] for i, k in enumerate(keys)}
        return self.recombine._mlp_targets(lk, log_probas,
                                           compute_dtype=self.matmul_dtype)

    def __call__(self, leak_dict: Dict[str, jax.Array]) -> Dict[str, jax.Array]:
        return self.forward(leak_dict)


# ----------------------------------------------------------------------------
# Pure-JAX reference (for correctness check)
# ----------------------------------------------------------------------------

def _ref_branch(br: Branch, x: jax.Array) -> jax.Array:
    xb = (x - br.bn0_mean) / jnp.sqrt(br.bn0_var + _BN_EPS) * br.bn0_gamma + br.bn0_beta
    h = jnp.maximum(jnp.dot(xb, br.w1, precision=_HI) + br.b1, 0.0)
    hb = (h - br.bn1_mean) / jnp.sqrt(br.bn1_var + _BN_EPS) * br.bn1_gamma + br.bn1_beta
    return jnp.dot(hb, br.w2, precision=_HI) + br.b2


def _ref_recombine(rec: NaiveRecombine, leakages: Dict[str, jax.Array]):
    log_probas = {k: jax.nn.log_softmax(v, axis=-1) for k, v in leakages.items()}
    lk = leakages
    if rec.normalize_probs:
        lk = {k: jax.nn.softmax(v, axis=-1) for k, v in leakages.items()}
    p_beta = [v for k, v in lk.items() if "beta" in k]
    for mk in [k for k in lk if "masked" in k]:
        cat = jnp.concatenate(p_beta + [lk[mk]], axis=-1)
        r = jnp.maximum(jnp.dot(cat, rec.w1, precision=_HI) + rec.b1, 0.0)
        r = jnp.dot(r, rec.w2, precision=_HI) + rec.b2
        log_probas["target_" + mk.split("_")[1]] = jax.nn.log_softmax(r, axis=-1)
    return log_probas


def _reference_forward(model: KnownPoI, leak_dict: Dict[str, jax.Array]):
    branch_res = {k: _ref_branch(model.branches[k], v) for k, v in leak_dict.items()}
    return _ref_recombine(model.recombine, branch_res)


# ----------------------------------------------------------------------------
# Demo / self-test
# ----------------------------------------------------------------------------

if __name__ == "__main__":
    key = jax.random.PRNGKey(0)
    n_bits = 8
    n_classes = 1 << n_bits            # 256, lane-aligned
    batch = 16
    leakage_dims = {"beta_mask": 12, "masked_sbox": 20}

    k_model, k_d1, k_d2 = jax.random.split(key, 3)
    leak_dict = {
        "beta_mask":   jax.random.normal(k_d1, (batch, leakage_dims["beta_mask"]),
                                         dtype=jnp.float32),
        "masked_sbox": jax.random.normal(k_d2, (batch, leakage_dims["masked_sbox"]),
                                         dtype=jnp.float32),
    }
    expected_keys = {"beta_mask", "masked_sbox", "target_sbox"}

    def check(out, ref, tol):
        assert set(out.keys()) == expected_keys, f"unexpected keys: {set(out.keys())}"
        for k in sorted(expected_keys):
            assert out[k].shape == (batch, n_classes), f"bad shape {k}: {out[k].shape}"
            err = float(jnp.max(jnp.abs(out[k] - ref[k])))
            assert jnp.allclose(out[k], ref[k], atol=tol, rtol=tol), \
                f"mismatch for {k}: max abs err {err}"

    # 1) f32, normalize_probs=True (fused softmax epilogue path).
    model = KnownPoI(leakage_dims, n_hidden=32, n_shares=2, n_bits=n_bits,
                     normalize_probs=True, share_weights=False, key=k_model)
    out = jax.tree_util.tree_map(jax.block_until_ready, model(leak_dict))
    ref = _reference_forward(model, leak_dict)
    check(out, ref, 5e-4)

    # 2) Standalone NaiveRecombine.forward (unfused row-wise kernels path).
    scores = {k: _ref_branch(model.branches[k], v) for k, v in leak_dict.items()}
    out_rc = jax.tree_util.tree_map(jax.block_until_ready, model.recombine(scores))
    ref_rc = _ref_recombine(model.recombine, scores)
    for k in out_rc:
        assert jnp.allclose(out_rc[k], ref_rc[k], atol=5e-4, rtol=5e-4), \
            f"standalone recombine mismatch for {k}"

    # 3) f32, normalize_probs=False (raw-scores recombination path).
    model_nf = KnownPoI(leakage_dims, n_hidden=32, n_shares=2, n_bits=n_bits,
                        normalize_probs=False, share_weights=False, key=k_model)
    out_nf = jax.tree_util.tree_map(jax.block_until_ready, model_nf(leak_dict))
    check(out_nf, _reference_forward(model_nf, leak_dict), 5e-4)

    # 4) bf16 matmuls with f32 accumulation -- deliberately relaxed tolerance.
    model.matmul_dtype = jnp.bfloat16
    out_bf = jax.tree_util.tree_map(jax.block_until_ready, model(leak_dict))
    check(out_bf, ref, 5e-2)

    print("KERNEL_OK")
</pallas_src>

<mosaic_0001>
module attributes {stable_mosaic.version = 11 : i64} {
  func.func @_branch_kernel(%arg0: i32, %arg1: i32, %arg2: memref<1x16x20xf32, #tpu.memory_space<vmem>>, %arg3: memref<1x20x128xf32, #tpu.memory_space<vmem>>, %arg4: memref<1x1x128xf32, #tpu.memory_space<vmem>>, %arg5: memref<1x128x256xf32, #tpu.memory_space<vmem>>, %arg6: memref<1x1x256xf32, #tpu.memory_space<vmem>>, %arg7: memref<1x16x256xf32, #tpu.memory_space<vmem>>, %arg8: memref<1x16x256xf32, #tpu.memory_space<vmem>>) attributes {dimension_semantics = [#tpu.dimension_semantics<parallel>, #tpu.dimension_semantics<parallel>], iteration_bounds = array<i64: 2, 1>, scalar_prefetch = 0 : i64, scratch_operands = 0 : i64, tpu.core_type = #tpu.core_type<tc>, window_params = [{transform_indices = @transform_0, window_bounds = array<i64: 1, 16, 20>}, {transform_indices = @transform_1, window_bounds = array<i64: 1, 20, 128>}, {transform_indices = @transform_2, window_bounds = array<i64: 1, 1, 128>}, {transform_indices = @transform_3, window_bounds = array<i64: 1, 128, 256>}, {transform_indices = @transform_4, window_bounds = array<i64: 1, 1, 256>}, {transform_indices = @transform_5, window_bounds = array<i64: 1, 16, 256>}, {transform_indices = @transform_6, window_bounds = array<i64: 1, 16, 256>}]} {
    %c0 = arith.constant 0 : index
    %c0_0 = arith.constant 0 : index
    %c0_1 = arith.constant 0 : index
    %0 = vector.load %arg2[%c0, %c0_0, %c0_1] : memref<1x16x20xf32, #tpu.memory_space<vmem>>, vector<1x16x20xf32>
    %1 = vector.shape_cast %0 : vector<1x16x20xf32> to vector<16x20xf32>
    %c0_2 = arith.constant 0 : index
    %c0_3 = arith.constant 0 : index
    %c0_4 = arith.constant 0 : index
    %2 = vector.load %arg3[%c0_2, %c0_3, %c0_4] : memref<1x20x128xf32, #tpu.memory_space<vmem>>, vector<1x20x128xf32>
    %3 = vector.shape_cast %2 : vector<1x20x128xf32> to vector<20x128xf32>
    %cst = arith.constant dense<0.000000e+00> : vector<16x128xf32>
    %4 = tpu.matmul %1, %3, %cst {dimension_numbers = #tpu.dot_dimension_numbers<[1], [0], [0], [1], [0, 0, 1, 1], [], []>} : vector<16x20xf32>, vector<20x128xf32>, vector<16x128xf32> -> vector<16x128xf32>
    %c0_5 = arith.constant 0 : index
    %c0_6 = arith.constant 0 : index
    %c0_7 = arith.constant 0 : index
    %5 = vector.load %arg4[%c0_5, %c0_6, %c0_7] : memref<1x1x128xf32, #tpu.memory_space<vmem>>, vector<1x1x128xf32>
    %6 = vector.shape_cast %5 : vector<1x1x128xf32> to vector<1x128xf32>
    %7 = vector.broadcast %6 : vector<1x128xf32> to vector<16x128xf32>
    %8 = arith.addf %4, %7 : vector<16x128xf32>
    %cst_8 = arith.constant 0.000000e+00 : f32
    %9 = vector.broadcast %cst_8 : f32 to vector<16x128xf32>
    %10 = arith.maximumf %8, %9 : vector<16x128xf32>
    %c0_9 = arith.constant 0 : index
    %c0_10 = arith.constant 0 : index
    %c0_11 = arith.constant 0 : index
    %11 = vector.load %arg5[%c0_9, %c0_10, %c0_11] : memref<1x128x256xf32, #tpu.memory_space<vmem>>, vector<1x128x256xf32>
    %12 = vector.shape_cast %11 : vector<1x128x256xf32> to vector<128x256xf32>
    %cst_12 = arith.constant dense<0.000000e+00> : vector<16x256xf32>
    %13 = tpu.matmul %10, %12, %cst_12 {dimension_numbers = #tpu.dot_dimension_numbers<[1], [0], [0], [1], [0, 0, 1, 1], [], []>} : vector<16x128xf32>, vector<128x256xf32>, vector<16x256xf32> -> vector<16x256xf32>
    %c0_13 = arith.constant 0 : index
    %c0_14 = arith.constant 0 : index
    %c0_15 = arith.constant 0 : index
    %14 = vector.load %arg6[%c0_13, %c0_14, %c0_15] : memref<1x1x256xf32, #tpu.memory_space<vmem>>, vector<1x1x256xf32>
    %15 = vector.shape_cast %14 : vector<1x1x256xf32> to vector<1x256xf32>
    %16 = vector.broadcast %15 : vector<1x256xf32> to vector<16x256xf32>
    %17 = arith.addf %13, %16 : vector<16x256xf32>
    %cst_16 = arith.constant dense<0xFF800000> : vector<16xf32>
    %18 = vector.multi_reduction <maximumf>, %17, %cst_16 [1] : vector<16x256xf32> to vector<16xf32>
    %19 = vector.shape_cast %18 : vector<16xf32> to vector<16x1xf32>
    %20 = vector.broadcast %19 : vector<16x1xf32> to vector<16x256xf32>
    %21 = arith.subf %17, %20 : vector<16x256xf32>
    %22 = math.exp %21 : vector<16x256xf32>
    %cst_17 = arith.constant dense<0.000000e+00> : vector<16xf32>
    %23 = vector.multi_reduction <add>, %22, %cst_17 [1] : vector<16x256xf32> to vector<16xf32>
    %24 = vector.shape_cast %23 : vector<16xf32> to vector<16x1xf32>
    %25 = math.log %24 : vector<16x1xf32>
    %26 = vector.broadcast %25 : vector<16x1xf32> to vector<16x256xf32>
    %27 = arith.subf %21, %26 : vector<16x256xf32>
    %c0_18 = arith.constant 0 : index
    %c0_19 = arith.constant 0 : index
    %c0_20 = arith.constant 0 : index
    %28 = vector.load %arg7[%c0_18, %c0_19, %c0_20] : memref<1x16x256xf32, #tpu.memory_space<vmem>>, vector<1x16x256xf32>
    %29 = vector.shape_cast %28 : vector<1x16x256xf32> to vector<16x256xf32>
    %30 = vector.shape_cast %27 : vector<16x256xf32> to vector<1x16x256xf32>
    tpu.vector_store %arg7[%c0_18, %c0_19, %c0_20], %30 {strides = array<i32>} : memref<1x16x256xf32, #tpu.memory_space<vmem>>, vector<1x16x256xf32>,
    %31 = vector.broadcast %24 : vector<16x1xf32> to vector<16x256xf32>
    %32 = arith.divf %22, %31 : vector<16x256xf32>
    %c0_21 = arith.constant 0 : index
    %c0_22 = arith.constant 0 : index
    %c0_23 = arith.constant 0 : index
    %33 = vector.load %arg8[%c0_21, %c0_22, %c0_23] : memref<1x16x256xf32, #tpu.memory_space<vmem>>, vector<1x16x256xf32>
    %34 = vector.shape_cast %33 : vector<1x16x256xf32> to vector<16x256xf32>
    %35 = vector.shape_cast %32 : vector<16x256xf32> to vector<1x16x256xf32>
    tpu.vector_store %arg8[%c0_21, %c0_22, %c0_23], %35 {strides = array<i32>} : memref<1x16x256xf32, #tpu.memory_space<vmem>>, vector<1x16x256xf32>,
    return
  }
  func.func @transform_0(%arg0: i32, %arg1: i32) -> (i32, i32, i32) {
    %c0_i32 = arith.constant 0 : i32
    %c0_i32_0 = arith.constant 0 : i32
    return %arg0, %arg1, %c0_i32 : i32, i32, i32
  }
  func.func @transform_1(%arg0: i32, %arg1: i32) -> (i32, i32, i32) {
    %c0_i32 = arith.constant 0 : i32
    %c0_i32_0 = arith.constant 0 : i32
    %c0_i32_1 = arith.constant 0 : i32
    return %arg0, %c0_i32, %c0_i32_0 : i32, i32, i32
  }
  func.func @transform_2(%arg0: i32, %arg1: i32) -> (i32, i32, i32) {
    %c0_i32 = arith.constant 0 : i32
    %c0_i32_0 = arith.constant 0 : i32
    %c0_i32_1 = arith.constant 0 : i32
    return %arg0, %c0_i32, %c0_i32_0 : i32, i32, i32
  }
  func.func @transform_3(%arg0: i32, %arg1: i32) -> (i32, i32, i32) {
    %c0_i32 = arith.constant 0 : i32
    %c0_i32_0 = arith.constant 0 : i32
    %c0_i32_1 = arith.constant 0 : i32
    return %arg0, %c0_i32, %c0_i32_0 : i32, i32, i32
  }
  func.func @transform_4(%arg0: i32, %arg1: i32) -> (i32, i32, i32) {
    %c0_i32 = arith.constant 0 : i32
    %c0_i32_0 = arith.constant 0 : i32
    %c0_i32_1 = arith.constant 0 : i32
    return %arg0, %c0_i32, %c0_i32_0 : i32, i32, i32
  }
  func.func @transform_5(%arg0: i32, %arg1: i32) -> (i32, i32, i32) {
    %c0_i32 = arith.constant 0 : i32
    %c0_i32_0 = arith.constant 0 : i32
    return %arg0, %arg1, %c0_i32 : i32, i32, i32
  }
  func.func @transform_6(%arg0: i32, %arg1: i32) -> (i32, i32, i32) {
    %c0_i32 = arith.constant 0 : i32
    %c0_i32_0 = arith.constant 0 : i32
    return %arg0, %arg1, %c0_i32 : i32, i32, i32
  }
}

</mosaic_0001>

<llo_original>
// kernel: tpu_custom_call.1
$region0: #{tpu_custom_call.1}
  #allocation0 [shape = 'u32[]', space=smem, size = 0x4, offset = 0x4, fixed_abs, tag = 'smem constant byte address 0x4 - core index']
  #allocation1 [shape = 'u32[144,128]{1,0:T(1,128)}', space=vmem, size = 0x12000, scoped, tag = 'internal scratch']
  %s0 = inlined_call_operand.vmem [shape: f32[2,16,20], index: 0, kind: input, shape index: {}]
  %s1 = inlined_call_operand.vmem [shape: f32[2,20,128], index: 1, kind: input, shape index: {}]
  %s2 = inlined_call_operand.vmem [shape: f32[2,1,128], index: 2, kind: input, shape index: {}]
  %s3 = inlined_call_operand.hbm [shape: f32[2,128,256], index: 3, kind: input, shape index: {}]
  %s4 = inlined_call_operand.vmem [shape: f32[2,1,256], index: 4, kind: input, shape index: {}]
  %s5 = inlined_call_operand.hbm [shape: f32[2,16,256], index: 5, kind: output, shape index: {0}]
  %s6 = inlined_call_operand.hbm [shape: f32[2,16,256], index: 6, kind: output, shape index: {1}]
  %7 = xla_tuple %s5, %s6
  %s8 = sld [smem:[#allocation0]]
  $region65: #{tpu_custom_call.1} parent=0
    _
  %s10 = ssub.s32 1, %s8
  %s11 = scalar_select 0, %s10, %s8
  $region1: #{tpu_custom_call.1} parent=0
    #allocation2 [shape = 'u8[262144]{0}', space=vmem, size = 0x40000, scoped, tag = 'input window, operand 3']
    #allocation3 [shape = 's32[2]{0}', space=sflag, size = 0x8, scoped, tag = 'scoped memory for tpu_custom_call.1']
    #allocation4 [shape = 's32[2]{0}', space=sflag, size = 0x8, scoped, tag = 'scoped memory for tpu_custom_call.1']
    #allocation5 [shape = 'u8[32768]{0}', space=vmem, size = 0x8000, scoped, tag = 'output window, operand 0']
    #allocation6 [shape = 'u8[32768]{0}', space=vmem, size = 0x8000, scoped, tag = 'output window, operand 1']
    #allocation7 [shape = 's32[2]{0}', space=sflag, size = 0x8, scoped, tag = 'scoped memory for tpu_custom_call.1']
    %12 = vsyncpa [#allocation3], 0
    %s13 = scalar_lea.sflag [#allocation3], 1
    %14 = vsyncpa %s13, 0
    %15 = vsyncpa [#allocation4], 0
    %s16 = scalar_lea.sflag [#allocation4], 1
    %17 = vsyncpa %s16, 0
    %18 = vsyncpa [#allocation7], 0
    %s19 = scalar_lea.sflag [#allocation7], 1
    %20 = vsyncpa %s19, 0
    loop: start=0, step=1, limit=4
    $region2: #{tpu_custom_call.1} parent=1 // loop_pre_header
      _
    $region3: #{tpu_custom_call.1} parent=1 // loop_header
      %s22 = sphi 0, %s26
      %p23 = scmp.ge.s32.totalorder %s22, 4
      %s29 = sphi 0, %s41
      %s30 = sphi 0, %s37
      %s31 = sphi 0, %s29
      %s32 = sphi 0, %s30
      %s33 = sphi 0, %s31
      %s34 = sphi 0, %s32
      %s46 = sphi 0, %s48
      %s49 = sphi 0, %s46
      %s50 = sphi 0, %s49
      %s66 = sphi 0, %s50
      %s72 = sphi 0, %s74
      %s75 = sphi 0, %s72
      %s76 = sphi 0, %s75
      %s92 = sphi 0, %s76
      %s98 = sphi 0, %s100
      %s101 = sphi 0, %s98
      %s102 = sphi 0, %s101
      %s118 = sphi 0, %s102
      %s124 = sphi 0, %s126
      %s127 = sphi 0, %s124
      %s128 = sphi 0, %s127
      %s144 = sphi 0, %s128
      %s150 = sphi 0, %s152
      %s153 = sphi 0, %s150
      %s154 = sphi 0, %s153
      %s170 = sphi 0, %s154
      %s178 = sphi 0, %s180
      %s181 = sphi 0, %s178
      %s182 = sphi 0, %s181
      %s198 = sphi 0, %s182
      %s206 = sphi 0, %s208
      %s209 = sphi 0, %s206
      %s210 = sphi 0, %s209
      %s226 = sphi 0, %s210
    $region4: #{tpu_custom_call.1} parent=1 // loop_header_branch
      %25 = sbr.rel (%p23) target = $region8
    $region5: #{tpu_custom_call.1} parent=1 // loop_body
      %s27 = ssub.s32 %s22, 1
      %s28 = ssub.s32 %s22, 2
      %s35 = sadd.s32 1, %s30
      %p36 = scmp.ge.s32.totalorder %s35, 1
      %s37 = scalar_select %p36, 0, %s35
      %s38 = sadd.s32 1, %s29
      %s39 = scalar_select %p36, %s38, %s29
      %p40 = scmp.ge.s32.totalorder %s39, 2
      %s41 = scalar_select %p40, 0, %s39
      %s42 = ssub.s32 %s29, %s41
      %s43 = ssub.s32 %s30, %s37
      %s44 = sor.u32 %s42, %s43
      %p45 = scmp.eq.s32.totalorder %s44, 0
      %s47 = sadd.s32 %s46, 1
      %s48 = scalar_select %p45, %s46, %s47
      %p51 = pneg %p45
      %p52 = scmp.eq.s32.totalorder %s22, 1
      %p53 = por %p51, %p52
      %p54 = scmp.ne.s32.totalorder %s46, %s49
      %p55 = scmp.eq.s32.totalorder %s22, 0
      %p56 = por %p54, %p55
      %p57 = scmp.ne.s32.totalorder %s46, %s49
      %p58 = scmp.eq.s32.totalorder %s27, 1
      %p59 = por %p57, %p58
      %p60 = scmp.ne.s32.totalorder %s49, %s50
      %p61 = scmp.eq.s32.totalorder %s27, 0
      %p62 = por %p60, %p61
      %p63 = scmp.ne.s32.totalorder %s49, %s50
      %p64 = scmp.eq.s32.totalorder %s28, 1
      %p65 = por %p63, %p64
      %p67 = scmp.ne.s32.totalorder %s50, %s66
      %p68 = scmp.eq.s32.totalorder %s28, 0
      %p69 = por %p67, %p68
      %s70 = ssub.s32 %s29, %s41
      %p71 = scmp.eq.s32.totalorder %s70, 0
      %s73 = sadd.s32 %s72, 1
      %s74 = scalar_select %p71, %s72, %s73
      %p77 = pneg %p71
      %p78 = scmp.eq.s32.totalorder %s22, 1
      %p79 = por %p77, %p78
      %p80 = scmp.ne.s32.totalorder %s72, %s75
      %p81 = scmp.eq.s32.totalorder %s22, 0
      %p82 = por %p80, %p81
      %p83 = scmp.ne.s32.totalorder %s72, %s75
      %p84 = scmp.eq.s32.totalorder %s27, 1
      %p85 = por %p83, %p84
      %p86 = scmp.ne.s32.totalorder %s75, %s76
      %p87 = scmp.eq.s32.totalorder %s27, 0
      %p88 = por %p86, %p87
      %p89 = scmp.ne.s32.totalorder %s75, %s76
      %p90 = scmp.eq.s32.totalorder %s28, 1
      %p91 = por %p89, %p90
      %p93 = scmp.ne.s32.totalorder %s76, %s92
      %p94 = scmp.eq.s32.totalorder %s28, 0
      %p95 = por %p93, %p94
      %s96 = ssub.s32 %s29, %s41
      %p97 = scmp.eq.s32.totalorder %s96, 0
      %s99 = sadd.s32 %s98, 1
      %s100 = scalar_select %p97, %s98, %s99
      %p103 = pneg %p97
      %p104 = scmp.eq.s32.totalorder %s22, 1
      %p105 = por %p103, %p104
      %p106 = scmp.ne.s32.totalorder %s98, %s101
      %p107 = scmp.eq.s32.totalorder %s22, 0
      %p108 = por %p106, %p107
      %p109 = scmp.ne.s32.totalorder %s98, %s101
      %p110 = scmp.eq.s32.totalorder %s27, 1
      %p111 = por %p109, %p110
      %p112 = scmp.ne.s32.totalorder %s101, %s102
      %p113 = scmp.eq.s32.totalorder %s27, 0
      %p114 = por %p112, %p113
      %p115 = scmp.ne.s32.totalorder %s101, %s102
      %p116 = scmp.eq.s32.totalorder %s28, 1
      %p117 = por %p115, %p116
      %p119 = scmp.ne.s32.totalorder %s102, %s118
      %p120 = scmp.eq.s32.totalorder %s28, 0
      %p121 = por %p119, %p120
      %s122 = ssub.s32 %s29, %s41
      %p123 = scmp.eq.s32.totalorder %s122, 0
      %s125 = sadd.s32 %s124, 1
      %s126 = scalar_select %p123, %s124, %s125
      %p129 = pneg %p123
      %p130 = scmp.eq.s32.totalorder %s22, 1
      %p131 = por %p129, %p130
      %p132 = scmp.ne.s32.totalorder %s124, %s127
      %p133 = scmp.eq.s32.totalorder %s22, 0
      %p134 = por %p132, %p133
      %p135 = scmp.ne.s32.totalorder %s124, %s127
      %p136 = scmp.eq.s32.totalorder %s27, 1
      %p137 = por %p135, %p136
      %p138 = scmp.ne.s32.totalorder %s127, %s128
      %p139 = scmp.eq.s32.totalorder %s27, 0
      %p140 = por %p138, %p139
      %p141 = scmp.ne.s32.totalorder %s127, %s128
      %p142 = scmp.eq.s32.totalorder %s28, 1
      %p143 = por %p141, %p142
      %p145 = scmp.ne.s32.totalorder %s128, %s144
      %p146 = scmp.eq.s32.totalorder %s28, 0
      %p147 = por %p145, %p146
      %s148 = ssub.s32 %s29, %s41
      %p149 = scmp.eq.s32.totalorder %s148, 0
      %s151 = sadd.s32 %s150, 1
      %s152 = scalar_select %p149, %s150, %s151
      %p155 = pneg %p149
      %p156 = scmp.eq.s32.totalorder %s22, 1
      %p157 = por %p155, %p156
      %p158 = scmp.ne.s32.totalorder %s150, %s153
      %p159 = scmp.eq.s32.totalorder %s22, 0
      %p160 = por %p158, %p159
      %p161 = scmp.ne.s32.totalorder %s150, %s153
      %p162 = scmp.eq.s32.totalorder %s27, 1
      %p163 = por %p161, %p162
      %p164 = scmp.ne.s32.totalorder %s153, %s154
      %p165 = scmp.eq.s32.totalorder %s27, 0
      %p166 = por %p164, %p165
      %p167 = scmp.ne.s32.totalorder %s153, %s154
      %p168 = scmp.eq.s32.totalorder %s28, 1
      %p169 = por %p167, %p168
      %p171 = scmp.ne.s32.totalorder %s154, %s170
      %p172 = scmp.eq.s32.totalorder %s28, 0
      %p173 = por %p171, %p172
      %s174 = ssub.s32 %s29, %s41
      %s175 = ssub.s32 %s30, %s37
      %s176 = sor.u32 %s174, %s175
      %p177 = scmp.eq.s32.totalorder %s176, 0
      %s179 = sadd.s32 %s178, 1
      %s180 = scalar_select %p177, %s178, %s179
      %p183 = pneg %p177
      %p184 = scmp.eq.s32.totalorder %s22, 1
      %p185 = por %p183, %p184
      %p186 = scmp.ne.s32.totalorder %s178, %s181
      %p187 = scmp.eq.s32.totalorder %s22, 0
      %p188 = por %p186, %p187
      %p189 = scmp.ne.s32.totalorder %s178, %s181
      %p190 = scmp.eq.s32.totalorder %s27, 1
      %p191 = por %p189, %p190
      %p192 = scmp.ne.s32.totalorder %s181, %s182
      %p193 = scmp.eq.s32.totalorder %s27, 0
      %p194 = por %p192, %p193
      %p195 = scmp.ne.s32.totalorder %s181, %s182
      %p196 = scmp.eq.s32.totalorder %s28, 1
      %p197 = por %p195, %p196
      %p199 = scmp.ne.s32.totalorder %s182, %s198
      %p200 = scmp.eq.s32.totalorder %s28, 0
      %p201 = por %p199, %p200
      %s202 = ssub.s32 %s29, %s41
      %s203 = ssub.s32 %s30, %s37
      %s204 = sor.u32 %s202, %s203
      %p205 = scmp.eq.s32.totalorder %s204, 0
      %s207 = sadd.s32 %s206, 1
      %s208 = scalar_select %p205, %s206, %s207
      %p211 = pneg %p205
      %p212 = scmp.eq.s32.totalorder %s22, 1
      %p213 = por %p211, %p212
      %p214 = scmp.ne.s32.totalorder %s206, %s209
      %p215 = scmp.eq.s32.totalorder %s22, 0
      %p216 = por %p214, %p215
      %p217 = scmp.ne.s32.totalorder %s206, %s209
      %p218 = scmp.eq.s32.totalorder %s27, 1
      %p219 = por %p217, %p218
      %p220 = scmp.ne.s32.totalorder %s209, %s210
      %p221 = scmp.eq.s32.totalorder %s27, 0
      %p222 = por %p220, %p221
      %p223 = scmp.ne.s32.totalorder %s209, %s210
      %p224 = scmp.eq.s32.totalorder %s28, 1
      %p225 = por %p223, %p224
      %p227 = scmp.ne.s32.totalorder %s210, %s226
      %p228 = scmp.eq.s32.totalorder %s28, 0
      %p229 = por %p227, %p228
      %p230 = scmp.le.s32.totalorder 1, %s22
      %p231 = scmp.lt.s32.totalorder %s22, 3
      %p232 = pnand %p230, %p231
      %p233 = pneg %p232
      // Predicated region
      $region9: #{tpu_custom_call.1} parent=5 // pred_check
        _
      $region10: #{tpu_custom_call.1} parent=5 // pred_check_branch
        %235 = sbr.rel (%p232) target = $region12
      $region11: #{tpu_custom_call.1} parent=5 // pred_region
        %s236 = ssub.s32 %s22, 1
      $region12: #{tpu_custom_call.1} parent=5 // pred_fallthru
        _
      %p237 = scmp.lt.s32.totalorder %s22, 2
      // Predicated region
      $region13: #{tpu_custom_call.1} parent=5 // pred_check
        %p238 = pneg %p237
      $region14: #{tpu_custom_call.1} parent=5 // pred_check_branch
        %240 = sbr.rel (%p238) target = $region16
      $region15: #{tpu_custom_call.1} parent=5 // pred_region
        // Predicated region
        $region17: #{tpu_custom_call.1} parent=15 // pred_check
          %p241 = pneg %p56
        $region18: #{tpu_custom_call.1} parent=15 // pred_check_branch
          %243 = sbr.rel (%p241) target = $region20
        $region19: #{tpu_custom_call.1} parent=15 // pred_region
          %s244 = smul.u32 2, %s30
          %p245 = scmp.lt.s32.totalorder %s29, 1
          %s246 = scalar_select %p245, %s29, 1
          %p247 = scmp.lt.s32.totalorder %s244, 1
          %s248 = scalar_select %p247, %s244, 1
          %s249 = smul.addr %s246, 2
          %s250 = sadd.s32 %s248, %s249
          %s251 = smul.addr %s250, 8
          %s252 = scalar_lea.vmem %s0, %s251
          %s253 = smul.u32 2, %s30
        $region20: #{tpu_custom_call.1} parent=15 // pred_fallthru
          _
        // Predicated region
        $region21: #{tpu_custom_call.1} parent=15 // pred_check
          %p254 = pneg %p82
        $region22: #{tpu_custom_call.1} parent=15 // pred_check_branch
          %256 = sbr.rel (%p254) target = $region24
        $region23: #{tpu_custom_call.1} parent=15 // pred_region
          %p257 = scmp.lt.s32.totalorder %s29, 1
          %s258 = scalar_select %p257, %s29, 1
          %s259 = smul.addr %s258, 3
          %s260 = smul.addr %s259, 8
          %s261 = scalar_lea.vmem %s1, %s260
        $region24: #{tpu_custom_call.1} parent=15 // pred_fallthru
          _
        // Predicated region
        $region25: #{tpu_custom_call.1} parent=15 // pred_check
          %p262 = pneg %p108
        $region26: #{tpu_custom_call.1} parent=15 // pred_check_branch
          %264 = sbr.rel (%p262) target = $region28
        $region27: #{tpu_custom_call.1} parent=15 // pred_region
          %p265 = scmp.lt.s32.totalorder %s29, 1
          %s266 = scalar_select %p265, %s29, 1
          %s267 = scalar_lea.vmem %s2, %s266
        $region28: #{tpu_custom_call.1} parent=15 // pred_fallthru
          _
        // Predicated region
        $region29: #{tpu_custom_call.1} parent=15 // pred_check
          %p268 = pneg %p134
        $region30: #{tpu_custom_call.1} parent=15 // pred_check_branch
          %270 = sbr.rel (%p268) target = $region32
        $region31: #{tpu_custom_call.1} parent=15 // pred_region
          %s271 = sand.u32 %s124, 1
          %s272 = scalar_lea.sflag [#allocation3], %s271
          %s273 = sand.u32 %s124, 1
          %s274 = smul.addr %s273, 256
          %s275 = scalar_lea.vmem [#allocation2], %s274
          %s277 = ssub.s32 4096, 4096
          %278 = vsyncadd %s272, %s277
          %s279 = smul.addr %s29, 32
          %s280 = smul.addr %s279, 128
          %s281 = scalar_lea.hbm %s3, %s280
          %s282 = sshll.u32 %s275, 4
          %s283 = int_to_ptr.vmem [resolvable:$true] %s282
          %288 = dma.hbm_to_vmem [thread:$0]  %s281, 4096, %s283, %s272, 256, 256, 16
        $region32: #{tpu_custom_call.1} parent=15 // pred_fallthru
          _
        // Predicated region
        $region33: #{tpu_custom_call.1} parent=15 // pred_check
          %p289 = pneg %p160
        $region34: #{tpu_custom_call.1} parent=15 // pred_check_branch
          %291 = sbr.rel (%p289) target = $region36
        $region35: #{tpu_custom_call.1} parent=15 // pred_region
          %p292 = scmp.lt.s32.totalorder %s29, 1
          %s293 = scalar_select %p292, %s29, 1
          %s294 = smul.addr %s293, 2
          %s295 = scalar_lea.vmem %s4, %s294
        $region36: #{tpu_custom_call.1} parent=15 // pred_fallthru
          _
      $region16: #{tpu_custom_call.1} parent=5 // pred_fallthru
        _
      %p296 = scmp.le.s32.totalorder 1, %s22
      %p297 = scmp.lt.s32.totalorder %s22, 3
      %p298 = pnand %p296, %p297
      %p299 = pneg %p298
      // Predicated region
      $region37: #{tpu_custom_call.1} parent=5 // pred_check
        _
      $region38: #{tpu_custom_call.1} parent=5 // pred_check_branch
        %301 = sbr.rel (%p298) target = $region40
      $region39: #{tpu_custom_call.1} parent=5 // pred_region
        %s302 = ssub.s32 %s22, 1
        %s303 = sand.u32 %s127, 1
        %s304 = scalar_lea.sflag [#allocation3], %s303
        %s305 = sand.u32 %s127, 1
        %s306 = smul.addr %s305, 256
        %s307 = scalar_lea.vmem [#allocation2], %s306
        // Predicated region
        $region41: #{tpu_custom_call.1} parent=39 // pred_check
          %p308 = pneg %p140
        $region42: #{tpu_custom_call.1} parent=39 // pred_check_branch
          %310 = sbr.rel (%p308) target = $region44
        $region43: #{tpu_custom_call.1} parent=39 // pred_region
          %311 = dma.done %s304, 4096
        $region44: #{tpu_custom_call.1} parent=39 // pred_fallthru
          _
        %s312 = smul.u32 2, %s32
        %p313 = scmp.lt.s32.totalorder %s31, 1
        %s314 = scalar_select %p313, %s31, 1
        %p315 = scmp.lt.s32.totalorder %s312, 1
        %s316 = scalar_select %p315, %s312, 1
        %s317 = smul.addr %s314, 2
        %s318 = sadd.s32 %s316, %s317
        %s319 = smul.addr %s318, 8
        %s320 = scalar_lea.vmem %s0, %s319
        %p321 = pneg %p62
        %p322 = pneg %p59
        %p323 = scmp.lt.s32.totalorder %s31, 1
        %s324 = scalar_select %p323, %s31, 1
        %s325 = smul.addr %s324, 3
        %s326 = smul.addr %s325, 8
        %s327 = scalar_lea.vmem %s1, %s326
        %p328 = pneg %p88
        %p329 = pneg %p85
        %p330 = scmp.lt.s32.totalorder %s31, 1
        %s331 = scalar_select %p330, %s31, 1
        %s332 = scalar_lea.vmem %s2, %s331
        %p333 = pneg %p114
        %p334 = pneg %p111
        %s335 = sand.u32 %s127, 1
        %s336 = scalar_lea.sflag [#allocation3], %s335
        %s337 = sand.u32 %s127, 1
        %s338 = smul.addr %s337, 256
        %s339 = scalar_lea.vmem [#allocation2], %s338
        %p340 = pneg %p140
        %p341 = pneg %p137
        %p342 = scmp.lt.s32.totalorder %s31, 1
        %s343 = scalar_select %p342, %s31, 1
        %s344 = smul.addr %s343, 2
        %s345 = scalar_lea.vmem %s4, %s344
        %p346 = pneg %p166
        %p347 = pneg %p163
        %p348 = pneg %p194
        %p349 = pneg %p191
        %s350 = sand.u32 %s181, 1
        %s351 = scalar_lea.sflag [#allocation4], %s350
        %s352 = sand.u32 %s181, 1
        %s353 = smul.addr %s352, 32
        %s354 = scalar_lea.vmem [#allocation5], %s353
        %p355 = pneg %p222
        %p356 = pneg %p219
        %s357 = sand.u32 %s209, 1
        %s358 = scalar_lea.sflag [#allocation7], %s357
        %s359 = sand.u32 %s209, 1
        %s360 = smul.addr %s359, 32
        %s361 = scalar_lea.vmem [#allocation6], %s360
        %s362 = smul.u32 2, %s32
        %p363 = scmp.lt.s32.totalorder %s31, 1
        %s364 = scalar_select %p363, %s31, 1
        %p365 = scmp.lt.s32.totalorder %s362, 1
        %s366 = scalar_select %p365, %s362, 1
        %s367 = smul.addr %s364, 2
        %s368 = sadd.s32 %s366, %s367
        %s369 = smul.addr %s368, 8
        %s370 = scalar_lea.vmem %s0, %s369
        %s371 = smul.u32 2, %s32
        %p372 = scmp.lt.s32.totalorder %s31, 1
        %s373 = scalar_select %p372, %s31, 1
        %s374 = smul.addr %s373, 3
        %s375 = smul.addr %s374, 8
        %s376 = scalar_lea.vmem %s1, %s375
        %p377 = scmp.lt.s32.totalorder %s31, 1
        %s378 = scalar_select %p377, %s31, 1
        %s379 = scalar_lea.vmem %s2, %s378
        %p380 = scmp.lt.s32.totalorder %s31, 1
        %s381 = scalar_select %p380, %s31, 1
        %s382 = smul.addr %s381, 2
        %s383 = scalar_lea.vmem %s4, %s382
        %s384 = smul.u32 2, %s32
        %s385 = smul.u32 2, %s32
        %v386 = vld [vmem:[%s370] sm:$0xff]
        %v387 = vld [vmem:[%s370 + $0x8] sm:$0xff]
        %v388 = vld [vmem:[%s376] sm:$0xff]
        %v389 = vld [vmem:[%s376 + $0x8] sm:$0xff]
        %v390 = vld [vmem:[%s376 + $0x10] sm:$0xf]
        %v391 = vld [vmem:[%s379] sm:$0x1]
        %v393 = vlaneseq
        %v394 = vshrl.u32 %v393, 7
        %v395 = vsub.s32 0, %v394
        %v396 = vrot.slane %v391, %v395
        %vm398 = vcmask 162816
        %v400 = vsel %vm398, %v386, 0
        %v403 = vsel %vm398, %v387, 0
        %vm405 = vcmask 1043456
        %v407 = vsel %vm405, %v390, 0
        %409 = vmatprep.subr.mxu0 0.0
        %410 = vmatpush1.msra.mxu0 %v388
        %411 = vmatprep.subr.mxu0 0.0
        %412 = vmatpush1.msra.mxu0 %v389
        %413 = vmatprep.subr.mxu0 0.0
        %414 = vmatpush1.msra.mxu0 %v407
        %415 = vmatprep.subr.mxu0 0.0
        %416 = vmatpush1.msra.mxu0 0.0
        %417 = vmatprep.subr.mxu0 0.0
        %418 = vmatpush1.msra.mxu0 0.0
        %419 = vmatprep.subr.mxu0 0.0
        %420 = vmatpush1.msra.mxu0 0.0
        %421 = vmatprep.subr.mxu0 0.0
        %422 = vmatpush1.msra.mxu0 0.0
        %423 = vmatprep.subr.mxu0 0.0
        %424 = vmatpush1.msra.mxu0 0.0
        %425 = vmatprep.subr.mxu0 0.0
        %426 = vmatpush1.msra.mxu0 0.0
        %427 = vmatprep.subr.mxu0 0.0
        %428 = vmatpush1.msra.mxu0 0.0
        %429 = vmatprep.subr.mxu0 0.0
        %430 = vmatpush1.msra.mxu0 0.0
        %431 = vmatprep.subr.mxu0 0.0
        %432 = vmatpush1.msra.mxu0 0.0
        %433 = vmatprep.subr.mxu0 0.0
        %434 = vmatpush1.msra.mxu0 0.0
        %435 = vmatprep.subr.mxu0 0.0
        %436 = vmatpush1.msra.mxu0 0.0
        %437 = vmatprep.subr.mxu0 0.0
        %438 = vmatpush1.msra.mxu0 0.0
        %439 = vmatprep.subr.mxu0 0.0
        %440 = vmatpush1.msra.mxu0 0.0
        %441 = vmatprep.subr.mxu0 0.0
        %442 = vmatpush1.msra.mxu0 0.0
        %443 = vmatprep.subr.mxu0 0.0
        %444 = vmatpush1.msra.mxu0 0.0
        %445 = vmatprep.subr.mxu0 0.0
        %446 = vmatpush1.msra.mxu0 0.0
        %447 = vmatprep.subr.mxu0 0.0
        %448 = vmatpush1.msra.mxu0 0.0
        %449 = vmatprep.subr.mxu0 0.0
        %450 = vmatpush1.msra.mxu0 0.0
        %451 = vmatprep.subr.mxu0 0.0
        %452 = vmatpush1.msra.mxu0 0.0
        %453 = vmatprep.subr.mxu0 0.0
        %454 = vmatpush1.msra.mxu0 0.0
        %455 = vmatprep.subr.mxu0 0.0
        %456 = vmatpush1.msra.mxu0 0.0
        %457 = vmatprep.subr.mxu0 0.0
        %458 = vmatpush1.msra.mxu0 0.0
        %459 = vmatprep.subr.mxu0 0.0
        %460 = vmatpush1.msra.mxu0 0.0
        %461 = vmatprep.subr.mxu0 0.0
        %462 = vmatpush1.msra.mxu0 0.0
        %463 = vmatprep.subr.mxu0 0.0
        %464 = vmatpush1.msra.mxu0 0.0
        %465 = vmatprep.subr.mxu0 0.0
        %466 = vmatpush1.msra.mxu0 0.0
        %467 = vmatprep.subr.mxu0 0.0
        %468 = vmatpush1.msra.mxu0 0.0
        %469 = vmatprep.subr.mxu0 0.0
        %470 = vmatpush1.msra.mxu0 0.0
        %471 = vmatprep.subr.mxu0 0.0
        %472 = vmatpush1.msra.mxu0 0.0
        %473 = vmatprep.mubr.f32.mxu0 0.0
        %474 = vmatmul.mubr.f32.gmra.mrb[0].mxu0 %v400
        %v475 = vpop.f32.mrb[0].mxu0
        %v476 = vadd.f32 %v396, %v475
        %v477 = vpop.f32.mrb[0].mxu0
        %478 = vmatprep.mubr.f32.mxu0 0.0
        %479 = vmatmul.mubr.f32.gmra.mrb[0].mxu0 %v403
        %v480 = vpop.f32.mrb[0].mxu0
        %v481 = vadd.f32 %v396, %v480
        %v482 = vpop.f32.mrb[0].mxu0
        %483 = vdwg.mxu0
        %v484 = vmax.f32 %v476, 0.0
        %v485 = vmax.f32 %v481, 0.0
        %v486 = vld [vmem:[%s307] sm:$0xff]
        %v487 = vld [vmem:[%s307 + $0x8] sm:$0xff]
        %v488 = vld [vmem:[%s307 + $0x10] sm:$0xff]
        %v489 = vld [vmem:[%s307 + $0x18] sm:$0xff]
        %v490 = vld [vmem:[%s307 + $0x20] sm:$0xff]
        %v491 = vld [vmem:[%s307 + $0x28] sm:$0xff]
        %v492 = vld [vmem:[%s307 + $0x30] sm:$0xff]
        %v493 = vld [vmem:[%s307 + $0x38] sm:$0xff]
        %v494 = vld [vmem:[%s307 + $0x40] sm:$0xff]
        %v495 = vld [vmem:[%s307 + $0x48] sm:$0xff]
        %v496 = vld [vmem:[%s307 + $0x50] sm:$0xff]
        %v497 = vld [vmem:[%s307 + $0x58] sm:$0xff]
        %v498 = vld [vmem:[%s307 + $0x60] sm:$0xff]
        %v499 = vld [vmem:[%s307 + $0x68] sm:$0xff]
        %v500 = vld [vmem:[%s307 + $0x70] sm:$0xff]
        %v501 = vld [vmem:[%s307 + $0x78] sm:$0xff]
        %v502 = vld [vmem:[%s307 + $0x80] sm:$0xff]
        %v503 = vld [vmem:[%s307 + $0x88] sm:$0xff]
        %v504 = vld [vmem:[%s307 + $0x90] sm:$0xff]
        %v505 = vld [vmem:[%s307 + $0x98] sm:$0xff]
        %v506 = vld [vmem:[%s307 + $0xa0] sm:$0xff]
        %v507 = vld [vmem:[%s307 + $0xa8] sm:$0xff]
        %v508 = vld [vmem:[%s307 + $0xb0] sm:$0xff]
        %v509 = vld [vmem:[%s307 + $0xb8] sm:$0xff]
        %v510 = vld [vmem:[%s307 + $0xc0] sm:$0xff]
        %v511 = vld [vmem:[%s307 + $0xc8] sm:$0xff]
        %v512 = vld [vmem:[%s307 + $0xd0] sm:$0xff]
        %v513 = vld [vmem:[%s307 + $0xd8] sm:$0xff]
        %v514 = vld [vmem:[%s307 + $0xe0] sm:$0xff]
        %v515 = vld [vmem:[%s307 + $0xe8] sm:$0xff]
        %v516 = vld [vmem:[%s307 + $0xf0] sm:$0xff]
        %v517 = vld [vmem:[%s307 + $0xf8] sm:$0xff]
        %v518 = vld [vmem:[%s383] sm:$0x3]
        %v520 = vlaneseq
        %v521 = vshrl.u32 %v520, 7
        %v522 = vsub.s32 0, %v521
        %v523 = vrot.slane %v518, %v522
        %v524 = vlaneseq
        %v525 = vshrl.u32 %v524, 7
        %v526 = vsub.s32 1, %v525
        %v527 = vrot.slane %v518, %v526
        %530 = vmatprep.subr.mxu0 %v487
        %531 = vmatpush1.msra.mxu0 %v486
        %532 = vmatprep.subr.mxu0 %v489
        %533 = vmatpush1.msra.mxu0 %v488
        %534 = vmatprep.subr.mxu0 %v491
        %535 = vmatpush1.msra.mxu0 %v490
        %536 = vmatprep.subr.mxu0 %v493
        %537 = vmatpush1.msra.mxu0 %v492
        %538 = vmatprep.subr.mxu0 %v495
        %539 = vmatpush1.msra.mxu0 %v494
        %540 = vmatprep.subr.mxu0 %v497
        %541 = vmatpush1.msra.mxu0 %v496
        %542 = vmatprep.subr.mxu0 %v499
        %543 = vmatpush1.msra.mxu0 %v498
        %544 = vmatprep.subr.mxu0 %v501
        %545 = vmatpush1.msra.mxu0 %v500
        %546 = vmatprep.subr.mxu0 %v503
        %547 = vmatpush1.msra.mxu0 %v502
        %548 = vmatprep.subr.mxu0 %v505
        %549 = vmatpush1.msra.mxu0 %v504
        %550 = vmatprep.subr.mxu0 %v507
        %551 = vmatpush1.msra.mxu0 %v506
        %552 = vmatprep.subr.mxu0 %v509
        %553 = vmatpush1.msra.mxu0 %v508
        %554 = vmatprep.subr.mxu0 %v511
        %555 = vmatpush1.msra.mxu0 %v510
        %556 = vmatprep.subr.mxu0 %v513
        %557 = vmatpush1.msra.mxu0 %v512
        %558 = vmatprep.subr.mxu0 %v515
        %559 = vmatpush1.msra.mxu0 %v514
        %560 = vmatprep.subr.mxu0 %v517
        %561 = vmatpush1.msra.mxu0 %v516
        %562 = vmatprep.subr.mxu0 0.0
        %563 = vmatpush1.msra.mxu0 0.0
        %564 = vmatprep.subr.mxu0 0.0
        %565 = vmatpush1.msra.mxu0 0.0
        %566 = vmatprep.subr.mxu0 0.0
        %567 = vmatpush1.msra.mxu0 0.0
        %568 = vmatprep.subr.mxu0 0.0
        %569 = vmatpush1.msra.mxu0 0.0
        %570 = vmatprep.subr.mxu0 0.0
        %571 = vmatpush1.msra.mxu0 0.0
        %572 = vmatprep.subr.mxu0 0.0
        %573 = vmatpush1.msra.mxu0 0.0
        %574 = vmatprep.subr.mxu0 0.0
        %575 = vmatpush1.msra.mxu0 0.0
        %576 = vmatprep.subr.mxu0 0.0
        %577 = vmatpush1.msra.mxu0 0.0
        %578 = vmatprep.subr.mxu0 0.0
        %579 = vmatpush1.msra.mxu0 0.0
        %580 = vmatprep.subr.mxu0 0.0
        %581 = vmatpush1.msra.mxu0 0.0
        %582 = vmatprep.subr.mxu0 0.0
        %583 = vmatpush1.msra.mxu0 0.0
        %584 = vmatprep.subr.mxu0 0.0
        %585 = vmatpush1.msra.mxu0 0.0
        %586 = vmatprep.subr.mxu0 0.0
        %587 = vmatpush1.msra.mxu0 0.0
        %588 = vmatprep.subr.mxu0 0.0
        %589 = vmatpush1.msra.mxu0 0.0
        %590 = vmatprep.subr.mxu0 0.0
        %591 = vmatpush1.msra.mxu0 0.0
        %592 = vmatprep.subr.mxu0 0.0
        %593 = vmatpush1.msra.mxu0 0.0
        %594 = vmatprep.mubr.f32.mxu0 0.0
        %595 = vmatmul.mubr.f32.gmra.mrb[0].mxu0 %v484
        %v596 = vpop.f32.mrb[0].mxu0
        %v597 = vadd.f32 %v523, %v596
        %v598 = vpop.f32.mrb[0].mxu0
        %v599 = vadd.f32 %v527, %v598
        %600 = vmatprep.mubr.f32.mxu0 0.0
        %601 = vmatmul.mubr.f32.gmra.mrb[0].mxu0 %v485
        %v602 = vpop.f32.mrb[0].mxu0
        %v603 = vadd.f32 %v523, %v602
        %v604 = vpop.f32.mrb[0].mxu0
        %v605 = vadd.f32 %v527, %v604
        %606 = vdwg.mxu0
        %v607 = vmax.f32 %v597, %v599
        %608 = vmax.xlane.f32.xlu0 %v607
        %v609 = vpop.xlane.xlu0 %608
        %v610 = vmax.f32 %v603, %v605
        %611 = vmax.xlane.f32.xlu0 %v610
        %v612 = vpop.xlane.xlu0 %611
        %v613 = vsub.f32 %v597, %v609
        %v614 = vsub.f32 %v599, %v609
        %v615 = vsub.f32 %v603, %v612
        %v616 = vsub.f32 %v605, %v612
        %v617 = vmul.f32 %v613, 1.442695
        %v618 = vpow.pop %v617
        %v619 = vmul.f32 %v614, 1.442695
        %v620 = vpow.pop %v619
        %v621 = vmul.f32 %v615, 1.442695
        %v622 = vpow.pop %v621
        %v623 = vmul.f32 %v616, 1.442695
        %v624 = vpow.pop %v623
        %v625 = vadd.f32 %v618, %v620
        %626 = vadd.xlane.f32.xlu0 %v625
        %v627 = vpop.xlane.xlu0 %626
        %v628 = vadd.f32 %v622, %v624
        %629 = vadd.xlane.f32.xlu0 %v628
        %v630 = vpop.xlane.xlu0 %629
        %v631 = vlog2.pop %v627
        %v632 = vmul.f32 %v631, 0.6931472
        %v633 = vlog2.pop %v630
        %v634 = vmul.f32 %v633, 0.6931472
        %v635 = vsub.f32 %v613, %v632
        %v636 = vsub.f32 %v614, %v632
        %v637 = vsub.f32 %v615, %v634
        %v638 = vsub.f32 %v616, %v634
        %639 = vst [vmem:[%s354] sm:$0xff] %v635
        %640 = vst [vmem:[%s354 + $0x8] sm:$0xff] %v636
        %641 = vst [vmem:[%s354 + $0x10] sm:$0xff] %v637
        %642 = vst [vmem:[%s354 + $0x18] sm:$0xff] %v638
        %v643 = vrcp.pop %v627
        %v644 = vmul.f32 %v618, %v643
        %v645 = vmul.f32 %v620, %v643
        %v646 = vrcp.pop %v630
        %v647 = vmul.f32 %v622, %v646
        %v648 = vmul.f32 %v624, %v646
        %649 = vst [vmem:[%s361] sm:$0xff] %v644
        %650 = vst [vmem:[%s361 + $0x8] sm:$0xff] %v645
        %651 = vst [vmem:[%s361 + $0x10] sm:$0xff] %v647
        %652 = vst [vmem:[%s361 + $0x18] sm:$0xff] %v648
        %s653 = sand.u32 %s181, 1
        %s654 = scalar_lea.sflag [#allocation4], %s653
        %s655 = sand.u32 %s181, 1
        %s656 = smul.addr %s655, 32
        %s657 = scalar_lea.vmem [#allocation5], %s656
        %s658 = sand.u32 %s209, 1
        %s659 = scalar_lea.sflag [#allocation7], %s658
        %s660 = sand.u32 %s209, 1
        %s661 = smul.addr %s660, 32
        %s662 = scalar_lea.vmem [#allocation6], %s661
        // Predicated region
        $region45: #{tpu_custom_call.1} parent=39 // pred_check
          %p663 = pneg %p191
        $region46: #{tpu_custom_call.1} parent=39 // pred_check_branch
          %665 = sbr.rel (%p663) target = $region48
        $region47: #{tpu_custom_call.1} parent=39 // pred_region
          %s666 = smul.u32 2, %s32
          %s668 = ssub.s32 512, 512
          %669 = vsyncadd %s654, %s668
          %s670 = smul.addr %s666, 2
          %s671 = smul.addr %s31, 4
          %s672 = sadd.s32 %s670, %s671
          %s673 = smul.addr %s672, 128
          %s674 = scalar_lea.hbm %s5, %s673
          %s675 = sshll.u32 %s657, 4
          %s676 = int_to_ptr.vmem [resolvable:$true] %s675
          %681 = dma.vmem_to_hbm [thread:$0]  %s676, 512, %s674, %s654, 256, 256, 16
        $region48: #{tpu_custom_call.1} parent=39 // pred_fallthru
          _
        // Predicated region
        $region49: #{tpu_custom_call.1} parent=39 // pred_check
          %p682 = pneg %p219
        $region50: #{tpu_custom_call.1} parent=39 // pred_check_branch
          %684 = sbr.rel (%p682) target = $region52
        $region51: #{tpu_custom_call.1} parent=39 // pred_region
          %s685 = smul.u32 2, %s32
          %s687 = ssub.s32 512, 512
          %688 = vsyncadd %s659, %s687
          %s689 = smul.addr %s685, 2
          %s690 = smul.addr %s31, 4
          %s691 = sadd.s32 %s689, %s690
          %s692 = smul.addr %s691, 128
          %s693 = scalar_lea.hbm %s6, %s692
          %s694 = sshll.u32 %s662, 4
          %s695 = int_to_ptr.vmem [resolvable:$true] %s694
          %700 = dma.vmem_to_hbm [thread:$0]  %s695, 512, %s693, %s659, 256, 256, 16
        $region52: #{tpu_custom_call.1} parent=39 // pred_fallthru
          _
      $region40: #{tpu_custom_call.1} parent=5 // pred_fallthru
        _
      %p701 = scmp.le.s32.totalorder 2, %s22
      // Predicated region
      $region53: #{tpu_custom_call.1} parent=5 // pred_check
        %p702 = pneg %p701
      $region54: #{tpu_custom_call.1} parent=5 // pred_check_branch
        %704 = sbr.rel (%p702) target = $region56
      $region55: #{tpu_custom_call.1} parent=5 // pred_region
        %s705 = ssub.s32 %s22, 2
        // Predicated region
        $region57: #{tpu_custom_call.1} parent=55 // pred_check
          %p706 = pneg %p197
        $region58: #{tpu_custom_call.1} parent=55 // pred_check_branch
          %708 = sbr.rel (%p706) target = $region60
        $region59: #{tpu_custom_call.1} parent=55 // pred_region
          %s709 = sand.u32 %s182, 1
          %s710 = scalar_lea.sflag [#allocation4], %s709
          %s711 = sand.u32 %s182, 1
          %s712 = smul.addr %s711, 32
          %s713 = scalar_lea.vmem [#allocation5], %s712
          %714 = dma.done %s710, 512
        $region60: #{tpu_custom_call.1} parent=55 // pred_fallthru
          _
        // Predicated region
        $region61: #{tpu_custom_call.1} parent=55 // pred_check
          %p715 = pneg %p225
        $region62: #{tpu_custom_call.1} parent=55 // pred_check_branch
          %717 = sbr.rel (%p715) target = $region64
        $region63: #{tpu_custom_call.1} parent=55 // pred_region
          %s718 = sand.u32 %s210, 1
          %s719 = scalar_lea.sflag [#allocation7], %s718
          %s720 = sand.u32 %s210, 1
          %s721 = smul.addr %s720, 32
          %s722 = scalar_lea.vmem [#allocation6], %s721
          %723 = dma.done %s719, 512
        $region64: #{tpu_custom_call.1} parent=55 // pred_fallthru
          _
      $region56: #{tpu_custom_call.1} parent=5 // pred_fallthru
        _
    $region6: #{tpu_custom_call.1} parent=1 // loop_footer
      %s26 = sadd.s32 1, %s22
    $region7: #{tpu_custom_call.1} parent=1 // loop_footer_branch
      %21 = sbr.rel target = $region3
    $region8: #{tpu_custom_call.1} parent=1 // loop_exit
      _
    %724 = vsyncpa [#allocation3], 1
    %s725 = scalar_lea.sflag [#allocation3], 1
    %726 = vsyncpa %s725, 1
    %727 = vsyncpa [#allocation4], 1
    %s728 = scalar_lea.sflag [#allocation4], 1
    %729 = vsyncpa %s728, 1
    %730 = vsyncpa [#allocation7], 1
    %s731 = scalar_lea.sflag [#allocation7], 1
    %732 = vsyncpa %s731, 1

</llo_original>
